<compile_context>
chip_gen: v5e
topology: v5e:2x2
jax: 0.10.0
libtpu: 0.0.40
codegen_flags: <defaults>
</compile_context>

<pallas_src>
import functools
import math

import jax
import jax.numpy as jnp
from jax import lax
from jax.experimental import pallas as pl
from jax.experimental.pallas import tpu as pltpu


def _dice_loss_kernel(pred_ref, tar_ref, out_ref, num_acc, den_acc, *,
                      smooth, p, sig_consts, valid_extent, tile_sp,
                      rows_tiled, need_mask):
    s = pl.program_id(1)
    last = pl.num_programs(1) - 1

    @pl.when(s == 0)
    def _():
        num_acc[...] = jnp.zeros_like(num_acc)
        den_acc[...] = jnp.zeros_like(den_acc)

    # Fused argmax(channel) + sigmoid with first-occurrence tie-break:
    # descending-channel running max; `>=` selects the Python-time sigmoid(c)
    # constant, so the smallest tied channel index wins (== torch.argmax).
    C = pred_ref.shape[1]
    m = pred_ref[:, C - 1, :, :].astype(jnp.float32)           # (nb, Rt, Lt)
    prob = jnp.full_like(m, sig_consts[C - 1])
    for c in range(C - 2, -1, -1):
        xc = pred_ref[:, c, :, :].astype(jnp.float32)
        ge = xc >= m
        prob = jnp.where(ge, jnp.float32(sig_consts[c]), prob)
        m = jnp.maximum(xc, m)

    t = tar_ref[:, 0, :, :].astype(jnp.float32)                # (nb, Rt, Lt)

    if p == 1:
        prob_p, tar_p = prob, t
    elif p == 2:
        prob_p, tar_p = prob * prob, t * t
    else:
        prob_p, tar_p = jnp.power(prob, float(p)), jnp.power(t, float(p))

    inter = prob * t                        # (nb, Rt, Lt)
    both = prob_p + tar_p                   # (nb, Rt, Lt)

    def _accumulate(i_blk, b_blk):
        num_acc[...] += jnp.sum(i_blk, axis=(1, 2))[None, :]   # (1, nb)
        den_acc[...] += jnp.sum(b_blk, axis=(1, 2))[None, :]

    if need_mask:
        # Mask (iota/cmp/select) only on the ragged last spatial tile; the
        # mask is applied AFTER the arithmetic so OOB garbage (NaN/Inf) in
        # the un-padded last block is forced to 0 before accumulation.
        @pl.when(s != last)
        def _():
            _accumulate(inter, both)

        @pl.when(s == last)
        def _():
            axis = 1 if rows_tiled else 2
            idx = s * tile_sp + lax.broadcasted_iota(jnp.int32, inter.shape, axis)
            valid = idx < valid_extent
            _accumulate(jnp.where(valid, inter, 0.0),
                        jnp.where(valid, both, 0.0))
    else:
        _accumulate(inter, both)

    @pl.when(s == last)
    def _():
        num = 2.0 * num_acc[...] + smooth                      # (1, nb)
        den = den_acc[...] + smooth
        out_ref[...] = (1.0 - num / den)[None]                 # (1, 1, nb)


def dice_loss(pred, tar, smooth=1e-05, p=1):
    """pred: (N, C, H, W) any float dtype, tar: (N, 1, H, W) -> scalar f32."""
    N, C = pred.shape[0], pred.shape[1]
    HW = math.prod(pred.shape[2:])

    LANE, SUB = 128, 8

    # Put spatial pixels on sublanes AND lanes when possible (free reshape).
    if HW % LANE == 0:
        R, L = HW // LANE, LANE
    else:
        R, L = 1, HW

    pred_r = pred.reshape(N, C, R, L)       # native dtype, no pad, no upcast
    tar_r = tar.reshape(N, 1, R, L)

    TARGET = 1 << 20                        # ~1 MiB pred block per step
    itemsize = jnp.dtype(pred_r.dtype).itemsize

    if L == LANE:                           # tile rows (sublane axis)
        rows_tiled = True
        cap_rows = max(SUB, (TARGET // (C * LANE * itemsize)) // SUB * SUB)
        tile_r = R if R <= cap_rows else cap_rows
        tile_l = LANE
        n_sp = pl.cdiv(R, tile_r)
        tile_sp, valid_extent = tile_r, R
    else:                                   # HW not lane-divisible: tile lanes
        rows_tiled = False
        cap_l = max(LANE, (TARGET // (C * itemsize)) // LANE * LANE)
        tile_r = 1
        tile_l = HW if HW <= cap_l else cap_l
        n_sp = pl.cdiv(HW, tile_l)
        tile_sp, valid_extent = tile_l, HW
    need_mask = (valid_extent % tile_sp) != 0

    # Batch-block tiny images so each grid step moves a reasonable amount of
    # data, but keep >=2 batch blocks so v7x can split the "parallel" axis
    # across its two TensorCores.
    blk_bytes = C * tile_r * tile_l * itemsize
    if n_sp == 1 and blk_bytes < (512 << 10):
        nb = min(N, max(1, (512 << 10) // blk_bytes))
        nb = min(nb, max(1, pl.cdiv(N, 2)))
    else:
        nb = 1
    n_b = pl.cdiv(N, nb)

    # Python-time sigmoid constants for channel indices 0..C-1.
    sig_consts = tuple(1.0 / (1.0 + math.exp(-float(c))) for c in range(C))

    kernel = functools.partial(
        _dice_loss_kernel,
        smooth=float(smooth), p=p, sig_consts=sig_consts,
        valid_extent=valid_extent, tile_sp=tile_sp,
        rows_tiled=rows_tiled, need_mask=need_mask)

    if rows_tiled:
        pred_spec = pl.BlockSpec((nb, C, tile_r, tile_l), lambda b, sp: (b, 0, sp, 0))
        tar_spec = pl.BlockSpec((nb, 1, tile_r, tile_l), lambda b, sp: (b, 0, sp, 0))
    else:
        pred_spec = pl.BlockSpec((nb, C, tile_r, tile_l), lambda b, sp: (b, 0, 0, sp))
        tar_spec = pl.BlockSpec((nb, 1, tile_r, tile_l), lambda b, sp: (b, 0, 0, sp))

    losses = pl.pallas_call(
        kernel,
        out_shape=jax.ShapeDtypeStruct((n_b, 1, nb), jnp.float32),
        grid_spec=pltpu.PrefetchScalarGridSpec(
            num_scalar_prefetch=0,
            grid=(n_b, n_sp),                           # reduction axis last
            in_specs=[pred_spec, tar_spec],
            out_specs=pl.BlockSpec((1, 1, nb), lambda b, sp: (b, 0, 0)),
            scratch_shapes=[pltpu.VMEM((1, nb), jnp.float32),   # sum(prob*tar)
                            pltpu.VMEM((1, nb), jnp.float32)],  # sum(prob^p+tar^p)
        ),
        compiler_params=pltpu.CompilerParams(
            dimension_semantics=("parallel", "arbitrary"),
            vmem_limit_bytes=32 * 1024 * 1024,
        ),
    )(pred_r, tar_r)

    # Ragged batch tail (garbage per-sample losses) is sliced off, no jnp.pad.
    return jnp.mean(losses.reshape(-1)[:N])


def _dice_loss_ref(pred, tar, smooth=1e-05, p=1):
    """Pure-JAX reference mirroring the PyTorch module."""
    idx = jnp.argmax(pred, axis=1).astype(jnp.float32).reshape(pred.shape[0], -1)
    prob = jax.nn.sigmoid(idx)
    t = tar.reshape(tar.shape[0], -1).astype(jnp.float32)
    num = 2.0 * jnp.sum(prob * t, axis=1) + smooth
    den = jnp.sum(prob**p + t**p, axis=1) + smooth
    return jnp.mean(1.0 - num / den)


if __name__ == "__main__":
    key = jax.random.PRNGKey(0)
    k1, k2 = jax.random.split(key)

    N, C, H, W = 2, 4, 16, 16
    # Native-dtype inputs: bf16 logits, float mask (kernel casts in-register).
    pred = jax.random.normal(k1, (N, C, H, W), dtype=jnp.float32).astype(jnp.bfloat16)
    tar = (jax.random.uniform(k2, (N, 1, H, W)) > 0.5).astype(jnp.float32)

    out = jax.block_until_ready(dice_loss(pred, tar))
    ref = jax.block_until_ready(_dice_loss_ref(pred, tar))
    assert jnp.allclose(out, ref, atol=1e-4, rtol=1e-4), (out, ref)

    print("KERNEL_OK")
</pallas_src>

<mosaic_0001>
module attributes {stable_mosaic.version = 11 : i64} {
  func.func @_dice_loss_kernel(%arg0: i32, %arg1: i32, %arg2: memref<1x4x2x128xbf16, #tpu.memory_space<vmem>>, %arg3: memref<1x1x2x128xf32, #tpu.memory_space<vmem>>, %arg4: memref<1x1x1xf32, #tpu.memory_space<vmem>>, %arg5: memref<1x1xf32, #tpu.memory_space<vmem>>, %arg6: memref<1x1xf32, #tpu.memory_space<vmem>>) attributes {dimension_semantics = [#tpu.dimension_semantics<parallel>, #tpu.dimension_semantics<arbitrary>], iteration_bounds = array<i64: 2, 1>, scalar_prefetch = 0 : i64, scratch_operands = 2 : i64, tpu.core_type = #tpu.core_type<tc>, window_params = [{transform_indices = @transform_0, window_bounds = array<i64: 1, 4, 2, 128>}, {transform_indices = @transform_1, window_bounds = array<i64: 1, 1, 2, 128>}, {transform_indices = @transform_2, window_bounds = array<i64: 1, 1, 1>}]} {
    %c0_i32 = arith.constant 0 : i32
    %0 = arith.cmpi eq, %arg1, %c0_i32 : i32
    %1 = arith.extui %0 : i1 to i32
    %c0_i32_0 = arith.constant 0 : i32
    %2 = arith.cmpi ne, %1, %c0_i32_0 : i32
    scf.if %2 {
      %cst_32 = arith.constant 0.000000e+00 : f32
      %44 = vector.broadcast %cst_32 : f32 to vector<1x1xf32>
      %c0_33 = arith.constant 0 : index
      %c0_34 = arith.constant 0 : index
      %45 = vector.load %arg5[%c0_33, %c0_34] : memref<1x1xf32, #tpu.memory_space<vmem>>, vector<1x1xf32>
      tpu.vector_store %arg5[%c0_33, %c0_34], %44 {strides = array<i32>} : memref<1x1xf32, #tpu.memory_space<vmem>>, vector<1x1xf32>,
      %cst_35 = arith.constant 0.000000e+00 : f32
      %46 = vector.broadcast %cst_35 : f32 to vector<1x1xf32>
      %c0_36 = arith.constant 0 : index
      %c0_37 = arith.constant 0 : index
      %47 = vector.load %arg6[%c0_36, %c0_37] : memref<1x1xf32, #tpu.memory_space<vmem>>, vector<1x1xf32>
      tpu.vector_store %arg6[%c0_36, %c0_37], %46 {strides = array<i32>} : memref<1x1xf32, #tpu.memory_space<vmem>>, vector<1x1xf32>,
    } else {
    }
    %c0 = arith.constant 0 : index
    %c3 = arith.constant 3 : index
    %c0_1 = arith.constant 0 : index
    %c0_2 = arith.constant 0 : index
    %3 = vector.load %arg2[%c0, %c3, %c0_1, %c0_2] : memref<1x4x2x128xbf16, #tpu.memory_space<vmem>>, vector<1x1x2x128xbf16>
    %4 = vector.shape_cast %3 : vector<1x1x2x128xbf16> to vector<1x2x128xbf16>
    %5 = arith.extf %4 : vector<1x2x128xbf16> to vector<1x2x128xf32>
    %cst = arith.constant 0.952574133 : f32
    %6 = vector.broadcast %cst : f32 to vector<1x2x128xf32>
    %c0_3 = arith.constant 0 : index
    %c2 = arith.constant 2 : index
    %c0_4 = arith.constant 0 : index
    %c0_5 = arith.constant 0 : index
    %7 = vector.load %arg2[%c0_3, %c2, %c0_4, %c0_5] : memref<1x4x2x128xbf16, #tpu.memory_space<vmem>>, vector<1x1x2x128xbf16>
    %8 = vector.shape_cast %7 : vector<1x1x2x128xbf16> to vector<1x2x128xbf16>
    %9 = arith.extf %8 : vector<1x2x128xbf16> to vector<1x2x128xf32>
    %10 = arith.cmpf oge, %9, %5 : vector<1x2x128xf32>
    %cst_6 = arith.constant 0.880797088 : f32
    %11 = vector.broadcast %cst_6 : f32 to vector<1x2x128xf32>
    %12 = arith.select %10, %11, %6 : vector<1x2x128xi1>, vector<1x2x128xf32>
    %13 = arith.maximumf %9, %5 : vector<1x2x128xf32>
    %c0_7 = arith.constant 0 : index
    %c1 = arith.constant 1 : index
    %c0_8 = arith.constant 0 : index
    %c0_9 = arith.constant 0 : index
    %14 = vector.load %arg2[%c0_7, %c1, %c0_8, %c0_9] : memref<1x4x2x128xbf16, #tpu.memory_space<vmem>>, vector<1x1x2x128xbf16>
    %15 = vector.shape_cast %14 : vector<1x1x2x128xbf16> to vector<1x2x128xbf16>
    %16 = arith.extf %15 : vector<1x2x128xbf16> to vector<1x2x128xf32>
    %17 = arith.cmpf oge, %16, %13 : vector<1x2x128xf32>
    %cst_10 = arith.constant 0.731058597 : f32
    %18 = vector.broadcast %cst_10 : f32 to vector<1x2x128xf32>
    %19 = arith.select %17, %18, %12 : vector<1x2x128xi1>, vector<1x2x128xf32>
    %20 = arith.maximumf %16, %13 : vector<1x2x128xf32>
    %c0_11 = arith.constant 0 : index
    %c0_12 = arith.constant 0 : index
    %c0_13 = arith.constant 0 : index
    %c0_14 = arith.constant 0 : index
    %21 = vector.load %arg2[%c0_11, %c0_12, %c0_13, %c0_14] : memref<1x4x2x128xbf16, #tpu.memory_space<vmem>>, vector<1x1x2x128xbf16>
    %22 = vector.shape_cast %21 : vector<1x1x2x128xbf16> to vector<1x2x128xbf16>
    %23 = arith.extf %22 : vector<1x2x128xbf16> to vector<1x2x128xf32>
    %24 = arith.cmpf oge, %23, %20 : vector<1x2x128xf32>
    %cst_15 = arith.constant 5.000000e-01 : f32
    %25 = vector.broadcast %cst_15 : f32 to vector<1x2x128xf32>
    %26 = arith.select %24, %25, %19 : vector<1x2x128xi1>, vector<1x2x128xf32>
    %c0_16 = arith.constant 0 : index
    %c0_17 = arith.constant 0 : index
    %c0_18 = arith.constant 0 : index
    %c0_19 = arith.constant 0 : index
    %27 = vector.load %arg3[%c0_16, %c0_17, %c0_18, %c0_19] : memref<1x1x2x128xf32, #tpu.memory_space<vmem>>, vector<1x1x2x128xf32>
    %28 = vector.shape_cast %27 : vector<1x1x2x128xf32> to vector<1x2x128xf32>
    %29 = arith.mulf %26, %28 : vector<1x2x128xf32>
    %30 = arith.addf %26, %28 : vector<1x2x128xf32>
    %c0_20 = arith.constant 0 : index
    %c0_21 = arith.constant 0 : index
    %31 = vector.load %arg5[%c0_20, %c0_21] : memref<1x1xf32, #tpu.memory_space<vmem>>, vector<1x1xf32>
    %cst_22 = arith.constant dense<0.000000e+00> : vector<1xf32>
    %32 = vector.multi_reduction <add>, %29, %cst_22 [1, 2] : vector<1x2x128xf32> to vector<1xf32>
    %33 = vector.shape_cast %32 : vector<1xf32> to vector<1x1xf32>
    %34 = arith.addf %31, %33 : vector<1x1xf32>
    %c0_23 = arith.constant 0 : index
    %c0_24 = arith.constant 0 : index
    %35 = vector.load %arg5[%c0_23, %c0_24] : memref<1x1xf32, #tpu.memory_space<vmem>>, vector<1x1xf32>
    tpu.vector_store %arg5[%c0_23, %c0_24], %34 {strides = array<i32>} : memref<1x1xf32, #tpu.memory_space<vmem>>, vector<1x1xf32>,
    %c0_25 = arith.constant 0 : index
    %c0_26 = arith.constant 0 : index
    %36 = vector.load %arg6[%c0_25, %c0_26] : memref<1x1xf32, #tpu.memory_space<vmem>>, vector<1x1xf32>
    %cst_27 = arith.constant dense<0.000000e+00> : vector<1xf32>
    %37 = vector.multi_reduction <add>, %30, %cst_27 [1, 2] : vector<1x2x128xf32> to vector<1xf32>
    %38 = vector.shape_cast %37 : vector<1xf32> to vector<1x1xf32>
    %39 = arith.addf %36, %38 : vector<1x1xf32>
    %c0_28 = arith.constant 0 : index
    %c0_29 = arith.constant 0 : index
    %40 = vector.load %arg6[%c0_28, %c0_29] : memref<1x1xf32, #tpu.memory_space<vmem>>, vector<1x1xf32>
    tpu.vector_store %arg6[%c0_28, %c0_29], %39 {strides = array<i32>} : memref<1x1xf32, #tpu.memory_space<vmem>>, vector<1x1xf32>,
    %c0_i32_30 = arith.constant 0 : i32
    %41 = arith.cmpi eq, %arg1, %c0_i32_30 : i32
    %42 = arith.extui %41 : i1 to i32
    %c0_i32_31 = arith.constant 0 : i32
    %43 = arith.cmpi ne, %42, %c0_i32_31 : i32
    scf.if %43 {
      %c0_32 = arith.constant 0 : index
      %c0_33 = arith.constant 0 : index
      %44 = vector.load %arg5[%c0_32, %c0_33] : memref<1x1xf32, #tpu.memory_space<vmem>>, vector<1x1xf32>
      %cst_34 = arith.constant 2.000000e+00 : f32
      %45 = vector.broadcast %cst_34 : f32 to vector<1x1xf32>
      %46 = arith.mulf %45, %44 : vector<1x1xf32>
      %cst_35 = arith.constant 9.99999974E-6 : f32
      %47 = vector.broadcast %cst_35 : f32 to vector<1x1xf32>
      %48 = arith.addf %46, %47 : vector<1x1xf32>
      %c0_36 = arith.constant 0 : index
      %c0_37 = arith.constant 0 : index
      %49 = vector.load %arg6[%c0_36, %c0_37] : memref<1x1xf32, #tpu.memory_space<vmem>>, vector<1x1xf32>
      %cst_38 = arith.constant 9.99999974E-6 : f32
      %50 = vector.broadcast %cst_38 : f32 to vector<1x1xf32>
      %51 = arith.addf %49, %50 : vector<1x1xf32>
      %52 = arith.divf %48, %51 : vector<1x1xf32>
      %cst_39 = arith.constant 1.000000e+00 : f32
      %53 = vector.broadcast %cst_39 : f32 to vector<1x1xf32>
      %54 = arith.subf %53, %52 : vector<1x1xf32>
      %55 = vector.shape_cast %54 : vector<1x1xf32> to vector<1x1x1xf32>
      %c0_40 = arith.constant 0 : index
      %c0_41 = arith.constant 0 : index
      %c0_42 = arith.constant 0 : index
      %56 = vector.load %arg4[%c0_40, %c0_41, %c0_42] : memref<1x1x1xf32, #tpu.memory_space<vmem>>, vector<1x1x1xf32>
      tpu.vector_store %arg4[%c0_40, %c0_41, %c0_42], %55 {strides = array<i32>} : memref<1x1x1xf32, #tpu.memory_space<vmem>>, vector<1x1x1xf32>,
    } else {
    }
    return
  }
  func.func @transform_0(%arg0: i32, %arg1: i32) -> (i32, i32, i32, i32) {
    %c0_i32 = arith.constant 0 : i32
    %c0_i32_0 = arith.constant 0 : i32
    %c0_i32_1 = arith.constant 0 : i32
    return %arg0, %c0_i32, %arg1, %c0_i32_0 : i32, i32, i32, i32
  }
  func.func @transform_1(%arg0: i32, %arg1: i32) -> (i32, i32, i32, i32) {
    %c0_i32 = arith.constant 0 : i32
    %c0_i32_0 = arith.constant 0 : i32
    %c0_i32_1 = arith.constant 0 : i32
    return %arg0, %c0_i32, %arg1, %c0_i32_0 : i32, i32, i32, i32
  }
  func.func @transform_2(%arg0: i32, %arg1: i32) -> (i32, i32, i32) {
    %c0_i32 = arith.constant 0 : i32
    %c0_i32_0 = arith.constant 0 : i32
    %c0_i32_1 = arith.constant 0 : i32
    return %arg0, %c0_i32, %c0_i32_0 : i32, i32, i32
  }
}

</mosaic_0001>

<llo_original>
// kernel: tpu_custom_call.1
$region0: #{tpu_custom_call.1}
  #allocation0 [shape = 'u32[]', space=smem, size = 0x4, offset = 0x4, fixed_abs, tag = 'smem constant byte address 0x4 - core index']
  #allocation1 [shape = 'u32[72,128]{1,0:T(1,128)}', space=vmem, size = 0x9000, scoped, tag = 'internal scratch']
  #allocation2 [shape = 'f32[1,1]{1,0:T(1,128)}', space=vmem, size = 0x200, scoped, tag = 'scratch operand']
  #allocation3 [shape = 'f32[1,1]{1,0:T(1,128)}', space=vmem, size = 0x200, scoped, tag = 'scratch operand']
  %s0 = inlined_call_operand.hbm [shape: bf16[2,4,2,128], index: 0, kind: input, shape index: {}]
  %s1 = inlined_call_operand.hbm [shape: f32[2,1,2,128], index: 1, kind: input, shape index: {}]
  %s2 = inlined_call_operand.vmem [shape: f32[2,1,1], index: 2, kind: output, shape index: {}]
  %s3 = sld [smem:[#allocation0]]
  $region57: #{tpu_custom_call.1} parent=0
    _
  %s5 = ssub.s32 1, %s3
  %s6 = scalar_select 0, %s5, %s3
  $region1: #{tpu_custom_call.1} parent=0
    #allocation4 [shape = 'u8[4096]{0}', space=vmem, size = 0x1000, scoped, tag = 'input window, operand 0']
    #allocation5 [shape = 's32[2]{0}', space=sflag, size = 0x8, scoped, tag = 'scoped memory for tpu_custom_call.1']
    #allocation6 [shape = 'u8[2048]{0}', space=vmem, size = 0x800, scoped, tag = 'input window, operand 1']
    #allocation7 [shape = 's32[2]{0}', space=sflag, size = 0x8, scoped, tag = 'scoped memory for tpu_custom_call.1']
    %7 = vsyncpa [#allocation5], 0
    %s8 = scalar_lea.sflag [#allocation5], 1
    %9 = vsyncpa %s8, 0
    %10 = vsyncpa [#allocation7], 0
    %s11 = scalar_lea.sflag [#allocation7], 1
    %12 = vsyncpa %s11, 0
    loop: start=0, step=1, limit=4
    $region2: #{tpu_custom_call.1} parent=1 // loop_pre_header
      _
    $region3: #{tpu_custom_call.1} parent=1 // loop_header
      %s14 = sphi 0, %s18
      %p15 = scmp.ge.s32.totalorder %s14, 4
      %s21 = sphi 0, %s33
      %s22 = sphi 0, %s29
      %s23 = sphi 0, %s21
      %s24 = sphi 0, %s22
      %s25 = sphi 0, %s23
      %s26 = sphi 0, %s24
      %s38 = sphi 0, %s40
      %s41 = sphi 0, %s38
      %s42 = sphi 0, %s41
      %s58 = sphi 0, %s42
      %s66 = sphi 0, %s68
      %s69 = sphi 0, %s66
      %s70 = sphi 0, %s69
      %s86 = sphi 0, %s70
      %s92 = sphi 0, %s94
      %s95 = sphi 0, %s92
      %s96 = sphi 0, %s95
      %s112 = sphi 0, %s96
    $region4: #{tpu_custom_call.1} parent=1 // loop_header_branch
      %17 = sbr.rel (%p15) target = $region8
    $region5: #{tpu_custom_call.1} parent=1 // loop_body
      %s19 = ssub.s32 %s14, 1
      %s20 = ssub.s32 %s14, 2
      %s27 = sadd.s32 1, %s22
      %p28 = scmp.ge.s32.totalorder %s27, 1
      %s29 = scalar_select %p28, 0, %s27
      %s30 = sadd.s32 1, %s21
      %s31 = scalar_select %p28, %s30, %s21
      %p32 = scmp.ge.s32.totalorder %s31, 2
      %s33 = scalar_select %p32, 0, %s31
      %s34 = ssub.s32 %s21, %s33
      %s35 = ssub.s32 %s22, %s29
      %s36 = sor.u32 %s34, %s35
      %p37 = scmp.eq.s32.totalorder %s36, 0
      %s39 = sadd.s32 %s38, 1
      %s40 = scalar_select %p37, %s38, %s39
      %p43 = pneg %p37
      %p44 = scmp.eq.s32.totalorder %s14, 1
      %p45 = por %p43, %p44
      %p46 = scmp.ne.s32.totalorder %s38, %s41
      %p47 = scmp.eq.s32.totalorder %s14, 0
      %p48 = por %p46, %p47
      %p49 = scmp.ne.s32.totalorder %s38, %s41
      %p50 = scmp.eq.s32.totalorder %s19, 1
      %p51 = por %p49, %p50
      %p52 = scmp.ne.s32.totalorder %s41, %s42
      %p53 = scmp.eq.s32.totalorder %s19, 0
      %p54 = por %p52, %p53
      %p55 = scmp.ne.s32.totalorder %s41, %s42
      %p56 = scmp.eq.s32.totalorder %s20, 1
      %p57 = por %p55, %p56
      %p59 = scmp.ne.s32.totalorder %s42, %s58
      %p60 = scmp.eq.s32.totalorder %s20, 0
      %p61 = por %p59, %p60
      %s62 = ssub.s32 %s21, %s33
      %s63 = ssub.s32 %s22, %s29
      %s64 = sor.u32 %s62, %s63
      %p65 = scmp.eq.s32.totalorder %s64, 0
      %s67 = sadd.s32 %s66, 1
      %s68 = scalar_select %p65, %s66, %s67
      %p71 = pneg %p65
      %p72 = scmp.eq.s32.totalorder %s14, 1
      %p73 = por %p71, %p72
      %p74 = scmp.ne.s32.totalorder %s66, %s69
      %p75 = scmp.eq.s32.totalorder %s14, 0
      %p76 = por %p74, %p75
      %p77 = scmp.ne.s32.totalorder %s66, %s69
      %p78 = scmp.eq.s32.totalorder %s19, 1
      %p79 = por %p77, %p78
      %p80 = scmp.ne.s32.totalorder %s69, %s70
      %p81 = scmp.eq.s32.totalorder %s19, 0
      %p82 = por %p80, %p81
      %p83 = scmp.ne.s32.totalorder %s69, %s70
      %p84 = scmp.eq.s32.totalorder %s20, 1
      %p85 = por %p83, %p84
      %p87 = scmp.ne.s32.totalorder %s70, %s86
      %p88 = scmp.eq.s32.totalorder %s20, 0
      %p89 = por %p87, %p88
      %s90 = ssub.s32 %s21, %s33
      %p91 = scmp.eq.s32.totalorder %s90, 0
      %s93 = sadd.s32 %s92, 1
      %s94 = scalar_select %p91, %s92, %s93
      %p97 = pneg %p91
      %p98 = scmp.eq.s32.totalorder %s14, 1
      %p99 = por %p97, %p98
      %p100 = scmp.ne.s32.totalorder %s92, %s95
      %p101 = scmp.eq.s32.totalorder %s14, 0
      %p102 = por %p100, %p101
      %p103 = scmp.ne.s32.totalorder %s92, %s95
      %p104 = scmp.eq.s32.totalorder %s19, 1
      %p105 = por %p103, %p104
      %p106 = scmp.ne.s32.totalorder %s95, %s96
      %p107 = scmp.eq.s32.totalorder %s19, 0
      %p108 = por %p106, %p107
      %p109 = scmp.ne.s32.totalorder %s95, %s96
      %p110 = scmp.eq.s32.totalorder %s20, 1
      %p111 = por %p109, %p110
      %p113 = scmp.ne.s32.totalorder %s96, %s112
      %p114 = scmp.eq.s32.totalorder %s20, 0
      %p115 = por %p113, %p114
      %p116 = scmp.le.s32.totalorder 1, %s14
      %p117 = scmp.lt.s32.totalorder %s14, 3
      %p118 = pnand %p116, %p117
      %p119 = pneg %p118
      // Predicated region
      $region9: #{tpu_custom_call.1} parent=5 // pred_check
        _
      $region10: #{tpu_custom_call.1} parent=5 // pred_check_branch
        %121 = sbr.rel (%p118) target = $region12
      $region11: #{tpu_custom_call.1} parent=5 // pred_region
        %s122 = ssub.s32 %s14, 1
      $region12: #{tpu_custom_call.1} parent=5 // pred_fallthru
        _
      %p123 = scmp.lt.s32.totalorder %s14, 2
      // Predicated region
      $region13: #{tpu_custom_call.1} parent=5 // pred_check
        %p124 = pneg %p123
      $region14: #{tpu_custom_call.1} parent=5 // pred_check_branch
        %126 = sbr.rel (%p124) target = $region16
      $region15: #{tpu_custom_call.1} parent=5 // pred_region
        // Predicated region
        $region17: #{tpu_custom_call.1} parent=15 // pred_check
          %p127 = pneg %p48
        $region18: #{tpu_custom_call.1} parent=15 // pred_check_branch
          %129 = sbr.rel (%p127) target = $region20
        $region19: #{tpu_custom_call.1} parent=15 // pred_region
          %s130 = sand.u32 %s38, 1
          %s131 = scalar_lea.sflag [#allocation5], %s130
          %s132 = sand.u32 %s38, 1
          %s133 = smul.addr %s132, 4
          %s134 = scalar_lea.vmem [#allocation4], %s133
          %136 = vsyncadd %s131, 0
          %s137 = smul.addr %s21, 4
          %s138 = sadd.s32 %s22, %s137
          %s139 = scalar_lea.hbm %s0, %s138
          %s140 = sshll.u32 %s139, 4
          %s141 = int_to_ptr.hbm [resolvable:$true] %s140
          %s142 = sshll.u32 %s134, 4
          %s143 = int_to_ptr.vmem [resolvable:$true] %s142
          %148 = dma.hbm_to_vmem [thread:$0]  %s141, 64, %s143, %s131, 16, 16, 1
        $region20: #{tpu_custom_call.1} parent=15 // pred_fallthru
          _
        // Predicated region
        $region21: #{tpu_custom_call.1} parent=15 // pred_check
          %p149 = pneg %p76
        $region22: #{tpu_custom_call.1} parent=15 // pred_check_branch
          %151 = sbr.rel (%p149) target = $region24
        $region23: #{tpu_custom_call.1} parent=15 // pred_region
          %s152 = sand.u32 %s66, 1
          %s153 = scalar_lea.sflag [#allocation7], %s152
          %s154 = sand.u32 %s66, 1
          %s155 = smul.addr %s154, 2
          %s156 = scalar_lea.vmem [#allocation6], %s155
          %158 = vsyncadd %s153, 0
          %s159 = sadd.s32 %s22, %s21
          %s160 = smul.addr %s159, 2
          %s161 = scalar_lea.hbm %s1, %s160
          %s163 = sshll.u32 %s161, 4
          %s164 = int_to_ptr.hbm [resolvable:$true] %s163
          %s165 = sshll.u32 %s156, 4
          %s166 = int_to_ptr.vmem [resolvable:$true] %s165
          %168 = dma.hbm_to_vmem [thread:$0]  %s164, 32, %s166, %s153
        $region24: #{tpu_custom_call.1} parent=15 // pred_fallthru
          _
      $region16: #{tpu_custom_call.1} parent=5 // pred_fallthru
        _
      %p169 = scmp.le.s32.totalorder 1, %s14
      %p170 = scmp.lt.s32.totalorder %s14, 3
      %p171 = pnand %p169, %p170
      %p172 = pneg %p171
      // Predicated region
      $region25: #{tpu_custom_call.1} parent=5 // pred_check
        _
      $region26: #{tpu_custom_call.1} parent=5 // pred_check_branch
        %174 = sbr.rel (%p171) target = $region28
      $region27: #{tpu_custom_call.1} parent=5 // pred_region
        %s175 = ssub.s32 %s14, 1
        %s176 = sand.u32 %s41, 1
        %s177 = scalar_lea.sflag [#allocation5], %s176
        %s178 = sand.u32 %s41, 1
        %s179 = smul.addr %s178, 4
        %s180 = scalar_lea.vmem [#allocation4], %s179
        // Predicated region
        $region29: #{tpu_custom_call.1} parent=27 // pred_check
          %p181 = pneg %p54
        $region30: #{tpu_custom_call.1} parent=27 // pred_check_branch
          %183 = sbr.rel (%p181) target = $region32
        $region31: #{tpu_custom_call.1} parent=27 // pred_region
          %185 = dma.done %s177, 64
        $region32: #{tpu_custom_call.1} parent=27 // pred_fallthru
          _
        %s186 = sand.u32 %s69, 1
        %s187 = scalar_lea.sflag [#allocation7], %s186
        %s188 = sand.u32 %s69, 1
        %s189 = smul.addr %s188, 2
        %s190 = scalar_lea.vmem [#allocation6], %s189
        // Predicated region
        $region33: #{tpu_custom_call.1} parent=27 // pred_check
          %p191 = pneg %p82
        $region34: #{tpu_custom_call.1} parent=27 // pred_check_branch
          %193 = sbr.rel (%p191) target = $region36
        $region35: #{tpu_custom_call.1} parent=27 // pred_region
          %195 = dma.done %s187, 32
        $region36: #{tpu_custom_call.1} parent=27 // pred_fallthru
          _
        %s196 = sand.u32 %s41, 1
        %s197 = scalar_lea.sflag [#allocation5], %s196
        %s198 = sand.u32 %s41, 1
        %s199 = smul.addr %s198, 4
        %s200 = scalar_lea.vmem [#allocation4], %s199
        %p201 = pneg %p54
        %p202 = pneg %p51
        %s203 = sand.u32 %s69, 1
        %s204 = scalar_lea.sflag [#allocation7], %s203
        %s205 = sand.u32 %s69, 1
        %s206 = smul.addr %s205, 2
        %s207 = scalar_lea.vmem [#allocation6], %s206
        %p208 = pneg %p82
        %p209 = pneg %p79
        %p210 = pneg %p108
        %p211 = pneg %p105
        %p212 = scmp.lt.s32.totalorder %s23, 1
        %s213 = scalar_select %p212, %s23, 1
        %s214 = scalar_lea.vmem %s2, %s213
        %p215 = scmp.lt.s32.totalorder %s23, 1
        %s216 = scalar_select %p215, %s23, 1
        %s217 = scalar_lea.vmem %s2, %s216
        %p218 = scmp.eq.s32.totalorder %s24, 0
        // Predicated region
        $region37: #{tpu_custom_call.1} parent=27 // pred_check
          %p219 = pneg %p218
        $region38: #{tpu_custom_call.1} parent=27 // pred_check_branch
          %221 = sbr.rel (%p219) target = $region40
        $region39: #{tpu_custom_call.1} parent=27 // pred_region
          %vm222 = vcmask 0
          %223 = vst.msk [vmem:[#allocation2] sm:$0x1] %vm222, 0.0
          %224 = vst.msk [vmem:[#allocation3] sm:$0x1] %vm222, 0.0
        $region40: #{tpu_custom_call.1} parent=27 // pred_fallthru
          _
        %s225 = scalar_lea.vmem %s180, 3 [#allocation4]
        %v226 = vld [vmem:[%s225] sm:$0x1]
        %v227 = vunpack.c.l.bf16 %v226
        %s228 = scalar_lea.vmem %s180, 2 [#allocation4]
        %v229 = vld [vmem:[%s228] sm:$0x1]
        %v230 = vunpack.c.l.bf16 %v229
        %vm231 = vcmp.ge.f32.partialorder %v230, %v227
        %v232 = vsel %vm231, 0.8807971, 0.95257413
        %v233 = vmax.f32 %v230, %v227
        %s234 = scalar_lea.vmem %s180, 1 [#allocation4]
        %v235 = vld [vmem:[%s234] sm:$0x1]
        %v236 = vunpack.c.l.bf16 %v235
        %vm237 = vcmp.ge.f32.partialorder %v236, %v233
        %v238 = vsel %vm237, 0.7310586, %v232
        %v239 = vmax.f32 %v236, %v233
        %v240 = vld [vmem:[%s180] sm:$0x1]
        %v241 = vunpack.c.l.bf16 %v240
        %vm242 = vcmp.ge.f32.partialorder %v241, %v239
        %v243 = vsel %vm242, 0.5, %v238
        %v244 = vld [vmem:[%s190] sm:$0x3]
        %v245 = vmul.f32 %v243, %v244
        %v246 = vadd.f32 %v243, %v244
        %v247 = vld [vmem:[#allocation2] sm:$0x1]
        %vm248 = vcmask 1041408
        %v249 = vsel %vm248, %v245, 0.0
        %250 = vadd.xlane.f32.xlu0 %v249
        %v251 = vpop.xlane.xlu0 %250
        %v252 = vrot.slane %v251, 4
        %v253 = vadd.f32 %v251, %v252
        %v254 = vrot.slane %v253, 2
        %v255 = vadd.f32 %v253, %v254
        %v256 = vrot.slane %v255, 1
        %v257 = vadd.f32 %v255, %v256
        %v258 = vadd.f32 %v247, %v257
        %vm259 = vcmask 0
        %260 = vst.msk [vmem:[#allocation2] sm:$0x1] %vm259, %v258
        %v261 = vld [vmem:[#allocation3] sm:$0x1]
        %v262 = vsel %vm248, %v246, 0.0
        %263 = vadd.xlane.f32.xlu0 %v262
        %v264 = vpop.xlane.xlu0 %263
        %v265 = vrot.slane %v264, 4
        %v266 = vadd.f32 %v264, %v265
        %v267 = vrot.slane %v266, 2
        %v268 = vadd.f32 %v266, %v267
        %v269 = vrot.slane %v268, 1
        %v270 = vadd.f32 %v268, %v269
        %v271 = vadd.f32 %v261, %v270
        %272 = vst.msk [vmem:[#allocation3] sm:$0x1] %vm259, %v271
        // Predicated region
        $region41: #{tpu_custom_call.1} parent=27 // pred_check
          %p273 = pneg %p218
        $region42: #{tpu_custom_call.1} parent=27 // pred_check_branch
          %275 = sbr.rel (%p273) target = $region44
        $region43: #{tpu_custom_call.1} parent=27 // pred_region
          %v276 = vld [vmem:[#allocation2] sm:$0x1]
          %v277 = vmul.f32 %v276, 2.0
          %v278 = vadd.f32 %v277, 1e-05
          %v279 = vld [vmem:[#allocation3] sm:$0x1]
          %v280 = vadd.f32 %v279, 1e-05
          %v281 = vrcp.pop %v280
          %v282 = vmul.f32 %v280, %v281
          %v283 = vsub.f32 1.0, %v282
          %v284 = vmul.f32 %v281, %v283
          %v285 = vadd.f32 %v281, %v284
          %vm286 = vweird.f32 %v280
          %vm287 = vweird.f32 %v281
          %vm288 = vmor %vm286, %vm287
          %v289 = vsel %vm288, %v281, %v285
          %v290 = vand.u32 2147483647, %v280
          %vm291 = vcmp.eq.f32.partialorder %v290, 8.507059e+37
          %v292 = vand.u32 %v280, 2147483648
          %v293 = vor.u32 1.1754944e-38, %v292
          %v294 = vsel %vm291, %v293, %v289
          %v295 = vmul.f32 %v278, %v294
          %v296 = vsub.f32 1.0, %v295
          %297 = vst.msk [vmem:[%s217] sm:$0x1] %vm259, %v296
        $region44: #{tpu_custom_call.1} parent=27 // pred_fallthru
          _
        %p298 = scmp.lt.s32.totalorder %s23, 1
        %s299 = scalar_select %p298, %s23, 1
        %s300 = scalar_lea.vmem %s2, %s299
        // Predicated region
        $region45: #{tpu_custom_call.1} parent=27 // pred_check
          %p301 = pneg %p105
        $region46: #{tpu_custom_call.1} parent=27 // pred_check_branch
          %303 = sbr.rel (%p301) target = $region48
        $region47: #{tpu_custom_call.1} parent=27 // pred_region
          _
        $region48: #{tpu_custom_call.1} parent=27 // pred_fallthru
          _
      $region28: #{tpu_custom_call.1} parent=5 // pred_fallthru
        _
      %p304 = scmp.le.s32.totalorder 2, %s14
      // Predicated region
      $region49: #{tpu_custom_call.1} parent=5 // pred_check
        %p305 = pneg %p304
      $region50: #{tpu_custom_call.1} parent=5 // pred_check_branch
        %307 = sbr.rel (%p305) target = $region52
      $region51: #{tpu_custom_call.1} parent=5 // pred_region
        %s308 = ssub.s32 %s14, 2
        // Predicated region
        $region53: #{tpu_custom_call.1} parent=51 // pred_check
          %p309 = pneg %p111
        $region54: #{tpu_custom_call.1} parent=51 // pred_check_branch
          %311 = sbr.rel (%p309) target = $region56
        $region55: #{tpu_custom_call.1} parent=51 // pred_region
          %p312 = scmp.lt.s32.totalorder %s25, 1
          %s313 = scalar_select %p312, %s25, 1
          %s314 = scalar_lea.vmem %s2, %s313
        $region56: #{tpu_custom_call.1} parent=51 // pred_fallthru
          _
      $region52: #{tpu_custom_call.1} parent=5 // pred_fallthru
        _
    $region6: #{tpu_custom_call.1} parent=1 // loop_footer
      %s18 = sadd.s32 1, %s14
    $region7: #{tpu_custom_call.1} parent=1 // loop_footer_branch
      %13 = sbr.rel target = $region3
    $region8: #{tpu_custom_call.1} parent=1 // loop_exit
      _
    %315 = vsyncpa [#allocation5], 1
    %s316 = scalar_lea.sflag [#allocation5], 1
    %317 = vsyncpa %s316, 1
    %318 = vsyncpa [#allocation7], 1
    %s319 = scalar_lea.sflag [#allocation7], 1
    %320 = vsyncpa %s319, 1

</llo_original>
